<compile_context>
chip_gen: v5e
topology: v5e:2x2
jax: 0.10.0
libtpu: 0.0.40
codegen_flags: <defaults>
</compile_context>

<pallas_src>
import jax
import jax.numpy as jnp
from jax import lax
from jax.experimental import pallas as pl
from jax.experimental.pallas import tpu as pltpu

LANE = 128  # TPU vreg lane width


def linear_add_relu_kernel(x_ref, w_ref, b_ref, other_ref, o_ref):
    # x_ref:     (N, IN)
    # w_ref:     (OUT_P, IN)   torch-layout weight, zero-padded to OUT_P lanes
    # b_ref:     (1, OUT_P)
    # other_ref: (N, OUT_P)    (aliased with o_ref's HBM buffer)
    # o_ref:     (N, OUT_P)
    other = other_ref[...]                      # load before storing (aliased out)
    # Contract x's last dim with w's last dim -> (N, OUT_P); no transpose needed.
    y = lax.dot_general(
        x_ref[...], w_ref[...],
        dimension_numbers=(((1,), (1,)), ((), ())),
        preferred_element_type=jnp.float32,
    )
    z = y + b_ref[...] + other
    o_ref[...] = jnp.maximum(z, 0.0).astype(o_ref.dtype)


@jax.jit
def linear_add_relu(x, weight, bias, other):
    """x: (N, IN), weight: (OUT, IN) torch layout, bias: (OUT,), other: (N, OUT)."""
    n, in_f = x.shape
    out_f = weight.shape[0]
    out_p = ((out_f + LANE - 1) // LANE) * LANE   # pad features to 128 lanes

    # Zero-pad feature dimension so the kernel's output is lane-dense.
    w_p = jnp.zeros((out_p, in_f), weight.dtype).at[:out_f, :].set(weight)
    b_p = jnp.zeros((1, out_p), bias.dtype).at[0, :out_f].set(bias)
    other_p = jnp.zeros((n, out_p), other.dtype).at[:, :out_f].set(other)

    out_padded = pl.pallas_call(
        linear_add_relu_kernel,
        out_shape=jax.ShapeDtypeStruct((n, out_p), jnp.float32),
        in_specs=[
            pl.BlockSpec(memory_space=pltpu.MemorySpace.VMEM),  # x
            pl.BlockSpec(memory_space=pltpu.MemorySpace.VMEM),  # weight (OUT_P, IN)
            pl.BlockSpec(memory_space=pltpu.MemorySpace.VMEM),  # bias (1, OUT_P)
            pl.BlockSpec(memory_space=pltpu.MemorySpace.VMEM),  # other (N, OUT_P)
        ],
        out_specs=pl.BlockSpec(memory_space=pltpu.MemorySpace.VMEM),
        input_output_aliases={3: 0},  # other_p buffer is reused as the output
    )(x, w_p, b_p, other_p)

    return out_padded[:, :out_f]


if __name__ == "__main__":
    key = jax.random.PRNGKey(0)
    k_x, k_o, k_w, k_b = jax.random.split(key, 4)

    N, IN_F, OUT_F = 16, 10, 10

    x = jax.random.normal(k_x, (N, IN_F), dtype=jnp.float32)
    other = jax.random.normal(k_o, (N, OUT_F), dtype=jnp.float32)

    # Deterministic parameter init mimicking torch.nn.Linear default:
    # U(-1/sqrt(in_features), 1/sqrt(in_features))
    bound = 1.0 / (IN_F ** 0.5)
    weight = jax.random.uniform(k_w, (OUT_F, IN_F), minval=-bound, maxval=bound,
                                dtype=jnp.float32)
    bias = jax.random.uniform(k_b, (OUT_F,), minval=-bound, maxval=bound,
                              dtype=jnp.float32)

    out = linear_add_relu(x, weight, bias, other)
    out = jax.block_until_ready(out)

    # Reference check in plain JAX
    ref = jnp.maximum(x @ weight.T + bias + other, 0.0)
    assert out.shape == (N, OUT_F)
    assert jnp.allclose(out, ref, atol=1e-5, rtol=1e-5)

    print("KERNEL_OK")
</pallas_src>

<mosaic_0001>
module attributes {stable_mosaic.version = 11 : i64} {
  func.func @linear_add_relu_kernel(%arg0: memref<16x10xf32, #tpu.memory_space<vmem>>, %arg1: memref<128x10xf32, #tpu.memory_space<vmem>>, %arg2: memref<1x128xf32, #tpu.memory_space<vmem>>, %arg3: memref<16x128xf32, #tpu.memory_space<vmem>>, %arg4: memref<16x128xf32, #tpu.memory_space<vmem>>) attributes {dimension_semantics = [], scalar_prefetch = 0 : i64, scratch_operands = 0 : i64, tpu.core_type = #tpu.core_type<tc>} {
    %c0 = arith.constant 0 : index
    %c0_0 = arith.constant 0 : index
    %0 = vector.load %arg3[%c0, %c0_0] : memref<16x128xf32, #tpu.memory_space<vmem>>, vector<16x128xf32>
    %c0_1 = arith.constant 0 : index
    %c0_2 = arith.constant 0 : index
    %1 = vector.load %arg0[%c0_1, %c0_2] : memref<16x10xf32, #tpu.memory_space<vmem>>, vector<16x10xf32>
    %c0_3 = arith.constant 0 : index
    %c0_4 = arith.constant 0 : index
    %2 = vector.load %arg1[%c0_3, %c0_4] : memref<128x10xf32, #tpu.memory_space<vmem>>, vector<128x10xf32>
    %cst = arith.constant dense<0.000000e+00> : vector<16x128xf32>
    %3 = tpu.matmul %1, %2, %cst {dimension_numbers = #tpu.dot_dimension_numbers<[1], [1], [0], [0], [0, 0, 1, 0], [], []>} : vector<16x10xf32>, vector<128x10xf32>, vector<16x128xf32> -> vector<16x128xf32>
    %c0_5 = arith.constant 0 : index
    %c0_6 = arith.constant 0 : index
    %4 = vector.load %arg2[%c0_5, %c0_6] : memref<1x128xf32, #tpu.memory_space<vmem>>, vector<1x128xf32>
    %5 = vector.broadcast %4 : vector<1x128xf32> to vector<16x128xf32>
    %6 = arith.addf %3, %5 : vector<16x128xf32>
    %7 = arith.addf %6, %0 : vector<16x128xf32>
    %cst_7 = arith.constant 0.000000e+00 : f32
    %8 = vector.broadcast %cst_7 : f32 to vector<16x128xf32>
    %9 = arith.maximumf %7, %8 : vector<16x128xf32>
    %c0_8 = arith.constant 0 : index
    %c0_9 = arith.constant 0 : index
    %10 = vector.load %arg4[%c0_8, %c0_9] : memref<16x128xf32, #tpu.memory_space<vmem>>, vector<16x128xf32>
    tpu.vector_store %arg4[%c0_8, %c0_9], %9 {strides = array<i32>} : memref<16x128xf32, #tpu.memory_space<vmem>>, vector<16x128xf32>,
    return
  }
}

</mosaic_0001>

<llo_original>
// kernel: linear_add_relu.1
$region0: #{linear_add_relu.1}
  #allocation0 [shape = 'u32[]', space=smem, size = 0x4, offset = 0x4, fixed_abs, tag = 'smem constant byte address 0x4 - core index']
  #allocation1 [shape = 'u32[72,128]{1,0:T(1,128)}', space=vmem, size = 0x9000, scoped, tag = 'internal scratch']
  %s0 = inlined_call_operand.vmem [shape: f32[16,10], index: 0, kind: input, shape index: {}]
  %s1 = inlined_call_operand.vmem [shape: f32[128,10], index: 1, kind: input, shape index: {}]
  %s2 = inlined_call_operand.vmem [shape: f32[1,128], index: 2, kind: input, shape index: {}]
  %s3 = inlined_call_operand.vmem [shape: f32[16,128], index: 3, kind: input, shape index: {}, may-alias: {3,4}]
  %s4 = inlined_call_operand.vmem [shape: f32[16,128], index: 4, kind: output, shape index: {}, may-alias: {3,4}]
  %s5 = sld [smem:[#allocation0]]
  $region26: #{linear_add_relu.1} parent=0
    _
  %s7 = ssub.s32 1, %s5
  %s8 = scalar_select 0, %s7, %s5
  // Predicated region
  $region2: #{linear_add_relu.1} parent=0 // pred_check
    _
  $region3: #{linear_add_relu.1} parent=0 // pred_check_branch
    %10 = sbr.rel (0) target = $region5
  $region4: #{linear_add_relu.1} parent=0 // pred_region
    _
  $region5: #{linear_add_relu.1} parent=0 // pred_fallthru
    _
  // Predicated region
  $region6: #{linear_add_relu.1} parent=0 // pred_check
    _
  $region7: #{linear_add_relu.1} parent=0 // pred_check_branch
    %12 = sbr.rel (0) target = $region9
  $region8: #{linear_add_relu.1} parent=0 // pred_region
    _
  $region9: #{linear_add_relu.1} parent=0 // pred_fallthru
    _
  // Predicated region
  $region10: #{linear_add_relu.1} parent=0 // pred_check
    _
  $region11: #{linear_add_relu.1} parent=0 // pred_check_branch
    %14 = sbr.rel (0) target = $region13
  $region12: #{linear_add_relu.1} parent=0 // pred_region
    _
  $region13: #{linear_add_relu.1} parent=0 // pred_fallthru
    _
  // Predicated region
  $region14: #{linear_add_relu.1} parent=0 // pred_check
    _
  $region15: #{linear_add_relu.1} parent=0 // pred_check_branch
    %16 = sbr.rel (0) target = $region17
  $region16: #{linear_add_relu.1} parent=0 // pred_region
    _
  $region17: #{linear_add_relu.1} parent=0 // pred_fallthru
    _
  %v17 = vld [vmem:[%s3] sm:$0xff]
  %v18 = vld [vmem:[%s3 + $0x8] sm:$0xff]
  %v19 = vld [vmem:[%s0] sm:$0xff]
  %v20 = vld [vmem:[%s0 + $0x8] sm:$0xff]
  %v21 = vld [vmem:[%s1] sm:$0xff]
  %v22 = vld [vmem:[%s1 + $0x8] sm:$0xff]
  %v23 = vld [vmem:[%s1 + $0x10] sm:$0xff]
  %v24 = vld [vmem:[%s1 + $0x18] sm:$0xff]
  %v25 = vld [vmem:[%s1 + $0x20] sm:$0xff]
  %v26 = vld [vmem:[%s1 + $0x28] sm:$0xff]
  %v27 = vld [vmem:[%s1 + $0x30] sm:$0xff]
  %v28 = vld [vmem:[%s1 + $0x38] sm:$0xff]
  %v29 = vld [vmem:[%s1 + $0x40] sm:$0xff]
  %v30 = vld [vmem:[%s1 + $0x48] sm:$0xff]
  %v31 = vld [vmem:[%s1 + $0x50] sm:$0xff]
  %v32 = vld [vmem:[%s1 + $0x58] sm:$0xff]
  %v33 = vld [vmem:[%s1 + $0x60] sm:$0xff]
  %v34 = vld [vmem:[%s1 + $0x68] sm:$0xff]
  %v35 = vld [vmem:[%s1 + $0x70] sm:$0xff]
  %v36 = vld [vmem:[%s1 + $0x78] sm:$0xff]
  %v37 = vld [vmem:[%s2] sm:$0x1]
  %v39 = vperm.slane %v37, 0
  %vm41 = vcmask 80896
  %v43 = vsel %vm41, %v19, 0
  %v46 = vsel %vm41, %v20, 0
  %v49 = vsel %vm41, %v21, 0
  %v52 = vsel %vm41, %v22, 0
  %v55 = vsel %vm41, %v23, 0
  %v58 = vsel %vm41, %v24, 0
  %v61 = vsel %vm41, %v25, 0
  %v64 = vsel %vm41, %v26, 0
  %v67 = vsel %vm41, %v27, 0
  %v70 = vsel %vm41, %v28, 0
  %v73 = vsel %vm41, %v29, 0
  %v76 = vsel %vm41, %v30, 0
  %v79 = vsel %vm41, %v31, 0
  %v82 = vsel %vm41, %v32, 0
  %v85 = vsel %vm41, %v33, 0
  %v88 = vsel %vm41, %v34, 0
  %v91 = vsel %vm41, %v35, 0
  %v94 = vsel %vm41, %v36, 0
  %96 = vmatpush.xpose.msra.mxu0 %v94
  %97 = vmatpush.xpose.msra.mxu0 %v91
  %98 = vmatpush.xpose.msra.mxu0 %v88
  %99 = vmatpush.xpose.msra.mxu0 %v85
  %100 = vmatpush.xpose.msra.mxu0 %v82
  %101 = vmatpush.xpose.msra.mxu0 %v79
  %102 = vmatpush.xpose.msra.mxu0 %v76
  %103 = vmatpush.xpose.msra.mxu0 %v73
  %104 = vmatpush.xpose.msra.mxu0 %v70
  %105 = vmatpush.xpose.msra.mxu0 %v67
  %106 = vmatpush.xpose.msra.mxu0 %v64
  %107 = vmatpush.xpose.msra.mxu0 %v61
  %108 = vmatpush.xpose.msra.mxu0 %v58
  %109 = vmatpush.xpose.msra.mxu0 %v55
  %110 = vmatpush.xpose.msra.mxu0 %v52
  %111 = vmatpush.xpose.msra.mxu0 %v49
  %112 = vmatmul.f32.gmra.mxu0 %v43
  %v113 = vpop.f32.mrf.mxu0
  %v114 = vadd.f32 %v39, %v113
  %115 = vmatmul.f32.gmra.mxu0 %v46
  %v116 = vpop.f32.mrf.mxu0
  %v117 = vadd.f32 %v39, %v116
  %118 = vdwg.mxu0
  %v119 = vadd.f32 %v114, %v17
  %v120 = vadd.f32 %v117, %v18
  %v121 = vmax.f32 %v119, 0.0
  %v122 = vmax.f32 %v120, 0.0
  %123 = vst [vmem:[%s4] sm:$0xff] %v121
  %124 = vst [vmem:[%s4 + $0x8] sm:$0xff] %v122
  // Predicated region
  $region18: #{linear_add_relu.1} parent=0 // pred_check
    _
  $region19: #{linear_add_relu.1} parent=0 // pred_check_branch
    %126 = sbr.rel (0) target = $region21
  $region20: #{linear_add_relu.1} parent=0 // pred_region
    _
  $region21: #{linear_add_relu.1} parent=0 // pred_fallthru
    _
  // Predicated region
  $region22: #{linear_add_relu.1} parent=0 // pred_check
    _
  $region23: #{linear_add_relu.1} parent=0 // pred_check_branch
    %128 = sbr.rel (0) target = $region25
  $region24: #{linear_add_relu.1} parent=0 // pred_region
    _
  $region25: #{linear_add_relu.1} parent=0 // pred_fallthru
    _

</llo_original>
